<compile_context>
chip_gen: v5e
topology: v5e:2x2
jax: 0.10.0
libtpu: 0.0.40
codegen_flags: <defaults>
</compile_context>

<pallas_src>
import jax
import jax.numpy as jnp
from jax.experimental import pallas as pl
from jax.experimental.pallas import tpu as pltpu

_MiB = 1024 * 1024
# Target ~4 MiB per tile buffer: >=85% of measured f32-copy HBM roofline on
# v6e, while 4x (in + out, each double-buffered) = 16 MiB stays comfortably
# under v7x's 64 MiB physical VMEM and the raised scoped limit below.
_TARGET_TILE_BYTES = 4 * _MiB
# Wide multiples of 128 lanes -> unmasked full-vreg `vst` stores
# (the biggest single in-kernel lever for a pure copy).
_LANE_WIDTH_CANDIDATES = (4096, 2048, 1024, 512, 256, 128)


def _identity_kernel(x_ref, o_ref):
    # Pure pass-through: copy the current VMEM tile to the output tile.
    o_ref[...] = x_ref[...]


def identity_map(x: jax.Array) -> jax.Array:
    """Pallas implementation of IdentityMap.forward(x) -> x (bit-exact copy).

    Note: the truly optimal lowering of identity is to return `x` unchanged;
    the pallas_call is kept so a real kernel exists, but the output aliases
    the input buffer so XLA can no-op it whenever the input is donated.
    """
    orig_shape = x.shape
    n = x.size
    if n == 0:
        return x  # nothing to copy

    itemsize = jnp.dtype(x.dtype).itemsize

    # 1) Present a lane-dense 2-D slab: last dim a wide multiple of 128 so
    #    stores are unmasked (no vst.msk partial stores).
    lane_width = None
    for w in _LANE_WIDTH_CANDIDATES:
        if n % w == 0:
            lane_width = w
            break
    if lane_width is None:
        # Total size doesn't factor into a multiple of 128: fall back to the
        # natural trailing dim (full-extent last-dim blocks are always legal).
        lane_width = orig_shape[-1] if (x.ndim >= 1 and orig_shape[-1] > 0) else n

    x2d = x.reshape(-1, lane_width)
    rows = x2d.shape[0]

    # 2) Size the row tile by *bytes* (~4 MiB / buffer), rounded down to the
    #    dtype's sublane packing: 8 (4-byte), 16 (2-byte), 32 (1-byte dtypes).
    sublane = max(8, 32 // max(itemsize, 1))
    row_bytes = lane_width * itemsize
    tile_rows = max(1, _TARGET_TILE_BYTES // row_bytes)
    if tile_rows >= rows:
        tile_rows = rows  # full-extent block: always legal, single grid step
    else:
        tile_rows = max(sublane, (tile_rows // sublane) * sublane)

    tile_bytes = tile_rows * row_bytes
    # in + out, each double-buffered by the BlockSpec pipeline, plus headroom.
    # Cap well under v7x's 64 MiB physical VMEM; raise above v5e's 16 MiB
    # scoped default so the larger tiles actually compile.
    vmem_limit = int(min(48 * _MiB, max(32 * _MiB, 4 * tile_bytes + 4 * _MiB)))

    grid = (pl.cdiv(rows, tile_rows),)

    out2d = pl.pallas_call(
        _identity_kernel,
        out_shape=jax.ShapeDtypeStruct((rows, lane_width), x.dtype),
        grid_spec=pltpu.PrefetchScalarGridSpec(
            num_scalar_prefetch=0,
            grid=grid,
            # Default depth-2 pipelining is kept: the kernel is purely
            # HBM-bandwidth bound, so extra buffers would only steal VMEM
            # from the tile size.
            in_specs=[pl.BlockSpec((tile_rows, lane_width), lambda i: (i, 0))],
            out_specs=pl.BlockSpec((tile_rows, lane_width), lambda i: (i, 0)),
        ),
        # Output aliases the input buffer: with a donated input XLA can elide
        # the copy entirely; otherwise it is a plain in-place rewrite.
        input_output_aliases={0: 0},
        compiler_params=pltpu.CompilerParams(
            # Row-tile axis is independent -> shards across v7x's 2 TCs.
            dimension_semantics=("parallel",),
            vmem_limit_bytes=vmem_limit,
        ),
    )(x2d)

    return out2d.reshape(orig_shape)


def identity_map_config():
    # Mirrors the `config` property of the PyTorch module.
    return {"projector_type": "identity"}


if __name__ == "__main__":
    key = jax.random.PRNGKey(0)
    # Small projector-style input: (batch=2, seq=8, hidden=32).
    x = jax.random.normal(key, (2, 8, 32), dtype=jnp.float32)

    y = identity_map(x)
    jax.block_until_ready(y)

    assert y.shape == x.shape and y.dtype == x.dtype
    assert bool(jnp.all(y == x))
    print("KERNEL_OK")
</pallas_src>

<mosaic_0001>
module attributes {stable_mosaic.version = 11 : i64} {
  func.func @_identity_kernel(%arg0: i32, %arg1: memref<1x512xf32, #tpu.memory_space<vmem>>, %arg2: memref<1x512xf32, #tpu.memory_space<vmem>>) attributes {dimension_semantics = [#tpu.dimension_semantics<parallel>], iteration_bounds = array<i64: 1>, scalar_prefetch = 0 : i64, scratch_operands = 0 : i64, tpu.core_type = #tpu.core_type<tc>, window_params = [{transform_indices = @transform_0, window_bounds = array<i64: 1, 512>}, {transform_indices = @transform_1, window_bounds = array<i64: 1, 512>}]} {
    %c0 = arith.constant 0 : index
    %c0_0 = arith.constant 0 : index
    %0 = vector.load %arg1[%c0, %c0_0] : memref<1x512xf32, #tpu.memory_space<vmem>>, vector<1x512xf32>
    %c0_1 = arith.constant 0 : index
    %c0_2 = arith.constant 0 : index
    %1 = vector.load %arg2[%c0_1, %c0_2] : memref<1x512xf32, #tpu.memory_space<vmem>>, vector<1x512xf32>
    tpu.vector_store %arg2[%c0_1, %c0_2], %0 {strides = array<i32>} : memref<1x512xf32, #tpu.memory_space<vmem>>, vector<1x512xf32>,
    return
  }
  func.func @transform_0(%arg0: i32) -> (i32, i32) {
    %c0_i32 = arith.constant 0 : i32
    %c0_i32_0 = arith.constant 0 : i32
    return %arg0, %c0_i32 : i32, i32
  }
  func.func @transform_1(%arg0: i32) -> (i32, i32) {
    %c0_i32 = arith.constant 0 : i32
    %c0_i32_0 = arith.constant 0 : i32
    return %arg0, %c0_i32 : i32, i32
  }
}

</mosaic_0001>

<llo_original>
// kernel: tpu_custom_call.1
$region0: #{tpu_custom_call.1}
  #allocation0 [shape = 'u32[]', space=smem, size = 0x4, offset = 0x4, fixed_abs, tag = 'smem constant byte address 0x4 - core index']
  #allocation1 [shape = 'u32[72,128]{1,0:T(1,128)}', space=vmem, size = 0x9000, scoped, tag = 'internal scratch']
  %s0 = inlined_call_operand.hbm [shape: f32[1,512], index: 0, kind: input, shape index: {}, may-alias: {0,1}]
  %s1 = inlined_call_operand.hbm [shape: f32[1,512], index: 1, kind: output, shape index: {}, may-alias: {0,1}]
  %s2 = sld [smem:[#allocation0]]
  $region18: #{tpu_custom_call.1} parent=0
    _
  %s4 = ssub.s32 1, %s2
  %s5 = scalar_select 0, %s4, %s2
  $region1: #{tpu_custom_call.1} parent=0
    #allocation2 [shape = 'u8[2048]{0}', space=vmem, size = 0x800, scoped, tag = 'input window, operand 0, single buffered']
    #allocation3 [shape = 's32[1]{0}', space=sflag, size = 0x4, scoped, tag = 'scoped memory for tpu_custom_call.1']
    #allocation4 [shape = 's32[1]{0}', space=sflag, size = 0x4, scoped, tag = 'scoped memory for tpu_custom_call.1']
    #allocation5 [shape = 'u8[2048]{0}', space=vmem, size = 0x800, scoped, tag = 'output window, operand 0, single buffered']
    %6 = vsyncpa [#allocation3], 0
    %7 = vsyncpa [#allocation4], 0
    // Predicated region
    $region2: #{tpu_custom_call.1} parent=1 // pred_check
      _
    $region3: #{tpu_custom_call.1} parent=1 // pred_check_branch
      %9 = sbr.rel (0) target = $region5
    $region4: #{tpu_custom_call.1} parent=1 // pred_region
      %11 = vsyncadd [#allocation3], 0
      %s13 = sshll.u32 %s0, 4
      %s14 = int_to_ptr.hbm [resolvable:$true] %s13
      %s15 = sshll.u32 [#allocation2], 4
      %s16 = int_to_ptr.vmem [resolvable:$true] %s15
      %18 = dma.hbm_to_vmem [thread:$0]  %s14, 64, %s16, [#allocation3]
    $region5: #{tpu_custom_call.1} parent=1 // pred_fallthru
      _
    // Predicated region
    $region6: #{tpu_custom_call.1} parent=1 // pred_check
      _
    $region7: #{tpu_custom_call.1} parent=1 // pred_check_branch
      %20 = sbr.rel (0) target = $region9
    $region8: #{tpu_custom_call.1} parent=1 // pred_region
      %22 = dma.done [#allocation3], 64
    $region9: #{tpu_custom_call.1} parent=1 // pred_fallthru
      _
    %v23 = vld [vmem:[#allocation2] sm:$0xf]
    %v24 = vlaneseq
    %vm25 = vcmp.ge.s32.totalorder %v24, 0
    %vm26 = vcmp.lt.s32.totalorder %v24, 512
    %vm27 = vmand %vm25, %vm26
    %28 = vst.msk [vmem:[#allocation5] sm:$0xf] %vm27, %v23
    // Predicated region
    $region10: #{tpu_custom_call.1} parent=1 // pred_check
      _
    $region11: #{tpu_custom_call.1} parent=1 // pred_check_branch
      %30 = sbr.rel (0) target = $region13
    $region12: #{tpu_custom_call.1} parent=1 // pred_region
      %32 = vsyncadd [#allocation4], 0
      %s34 = sshll.u32 [#allocation5], 4
      %s35 = int_to_ptr.vmem [resolvable:$true] %s34
      %s36 = sshll.u32 %s1, 4
      %s37 = int_to_ptr.hbm [resolvable:$true] %s36
      %39 = dma.vmem_to_hbm [thread:$0]  %s35, 64, %s37, [#allocation4]
    $region13: #{tpu_custom_call.1} parent=1 // pred_fallthru
      _
    // Predicated region
    $region14: #{tpu_custom_call.1} parent=1 // pred_check
      _
    $region15: #{tpu_custom_call.1} parent=1 // pred_check_branch
      %41 = sbr.rel (0) target = $region17
    $region16: #{tpu_custom_call.1} parent=1 // pred_region
      %43 = dma.done [#allocation4], 64
    $region17: #{tpu_custom_call.1} parent=1 // pred_fallthru
      _
    %44 = vsyncpa [#allocation3], 1
    %45 = vsyncpa [#allocation4], 1

</llo_original>
